<compile_context>
chip_gen: v7x
topology: tpu7x:2x2x1
jax: 0.10.0
libtpu: 0.0.40
codegen_flags: <defaults>
</compile_context>

<pallas_src>
import functools

import jax
import jax.numpy as jnp
from jax.experimental import pallas as pl
from jax.experimental.pallas import tpu as pltpu


def _round_up(x, m):
    return ((x + m - 1) // m) * m


def decoder_kernel(z_ref, w1_ref, b1_ref, w2_ref, b2_ref, w3_ref, b3_ref,
                   out_ref):
    """Fused 3-layer MLP decoder. One batch tile per grid step.

    Weights/biases are whole-array VMEM-resident refs. Matmul operands are
    cast to the weight dtype (bf16 on v6e/v7x); accumulation stays f32 via
    preferred_element_type. Bias add + nonlinearity run in f32.
    """
    cdt = w1_ref.dtype
    z = z_ref[...].astype(cdt)

    # hidden1 = relu(z @ W1 + b1)
    h1 = jnp.dot(z, w1_ref[...], preferred_element_type=jnp.float32)
    h1 = jnp.maximum(h1 + b1_ref[...], 0.0)

    # hidden2 = sigmoid(h1 @ W2 + b2)
    h2 = jnp.dot(h1.astype(cdt), w2_ref[...], preferred_element_type=jnp.float32)
    h2 = jax.nn.sigmoid(h2 + b2_ref[...])

    # output = sigmoid(h2 @ W3 + b3)   (W3/b3 columns padded to lane width)
    o = jnp.dot(h2.astype(cdt), w3_ref[...], preferred_element_type=jnp.float32)
    out_ref[...] = jax.nn.sigmoid(o + b3_ref[...]).astype(out_ref.dtype)


@functools.partial(jax.jit, static_argnames=("batch_tile", "compute_dtype"))
def decoder_forward(z, w1, b1, w2, b2, w3, b3, *,
                    batch_tile=128, compute_dtype=jnp.bfloat16):
    """z: (B, z_dim); w_i: (in_i, out_i); b_i: (1, out_i). Returns (B, out_dim) f32."""
    B, z_dim = z.shape
    out_dim = w3.shape[1]

    LANE = 128
    SUBLANE = 8

    # --- batch tiling: no divisibility requirement on B; pad to the tile. ---
    tile = _round_up(min(batch_tile, _round_up(B, SUBLANE)), SUBLANE)
    B_pad = _round_up(B, tile)
    if B_pad != B:
        z = jnp.pad(z, ((0, B_pad - B), (0, 0)))

    # --- lane-dense output: pad layer-3 columns to a multiple of 128 so the
    # output store is an unmasked full-lane vst; padded cols sliced off below.
    out_pad = _round_up(out_dim, LANE)
    if out_pad != out_dim:
        w3 = jnp.pad(w3, ((0, 0), (0, out_pad - out_dim)))
        b3 = jnp.pad(b3, ((0, 0), (0, out_pad - out_dim)))

    # bf16 matmul operands (f32 accumulation) on v6e/v7x; f32 on request/v5e.
    w1c = w1.astype(compute_dtype)
    w2c = w2.astype(compute_dtype)
    w3c = w3.astype(compute_dtype)

    grid = (B_pad // tile,)

    # Weights / biases are small: keep them whole-array resident in VMEM
    # (no block shape => no double-buffering, removed from pipeline bookkeeping).
    resident = pl.BlockSpec(memory_space=pltpu.MemorySpace.VMEM)
    # TODO(synk): if out_dim (alph_size*seq_len) grows large, add a second grid
    # axis over output columns and tile W3/b3/out by (h2_dim, 128+) instead of
    # keeping W3 fully resident, to bound VMEM (esp. v7x's 64 MiB).

    out = pl.pallas_call(
        decoder_kernel,
        out_shape=jax.ShapeDtypeStruct((B_pad, out_pad), jnp.float32),
        grid_spec=pltpu.PrefetchScalarGridSpec(
            num_scalar_prefetch=0,
            grid=grid,
            in_specs=[
                pl.BlockSpec((tile, z_dim), lambda i: (i, 0)),  # z (batch-tiled)
                resident,                                       # W1
                resident,                                       # b1
                resident,                                       # W2
                resident,                                       # b2
                resident,                                       # W3 (padded cols)
                resident,                                       # b3 (padded cols)
            ],
            out_specs=pl.BlockSpec((tile, out_pad), lambda i: (i, 0)),
        ),
        compiler_params=pltpu.CompilerParams(
            dimension_semantics=("parallel",)),
    )(z, w1c, b1, w2c, b2, w3c, b3)

    return out[:B, :out_dim]


def decoder_reference(z, w1, b1, w2, b2, w3, b3):
    """Pure-JAX reference (same math as the PyTorch module)."""
    h1 = jnp.maximum(z @ w1 + b1, 0.0)
    h2 = jax.nn.sigmoid(h1 @ w2 + b2)
    return jax.nn.sigmoid(h2 @ w3 + b3)


def init_linear(key, in_features, out_features):
    """PyTorch-style uniform init. Returns W transposed to (in, out), bias (1, out)."""
    kw, kb = jax.random.split(key)
    bound = 1.0 / jnp.sqrt(in_features)
    w = jax.random.uniform(kw, (out_features, in_features),
                           minval=-bound, maxval=bound, dtype=jnp.float32)
    b = jax.random.uniform(kb, (out_features,),
                           minval=-bound, maxval=bound, dtype=jnp.float32)
    return w.T, b.reshape(1, out_features)


if __name__ == "__main__":
    # Shapes consistent with the module's constructor:
    #   Decoder(alph_size=4, seq_len=8, z_dim=32, hidden_architecture=[128, 256])
    alph_size, seq_len = 4, 8
    z_dim = 32
    hidden = [128, 256]
    out_dim = alph_size * seq_len          # 32
    batch = 8

    key = jax.random.PRNGKey(0)
    kz, k1, k2, k3 = jax.random.split(key, 4)

    z = jax.random.normal(kz, (batch, z_dim), dtype=jnp.float32)
    w1, b1 = init_linear(k1, z_dim, hidden[0])
    w2, b2 = init_linear(k2, hidden[0], hidden[1])
    w3, b3 = init_linear(k3, hidden[1], out_dim)

    ref = decoder_reference(z, w1, b1, w2, b2, w3, b3)

    # 1) f32 operand path: exact match vs reference.
    out_f32 = jax.block_until_ready(
        decoder_forward(z, w1, b1, w2, b2, w3, b3,
                        batch_tile=128, compute_dtype=jnp.float32))
    assert out_f32.shape == (batch, out_dim)
    assert jnp.allclose(out_f32, ref, atol=1e-5, rtol=1e-5), "f32 mismatch"

    # 2) bf16 operand path (MXU-native on v6e/v7x), f32 accumulation.
    out_bf16 = jax.block_until_ready(
        decoder_forward(z, w1, b1, w2, b2, w3, b3,
                        batch_tile=128, compute_dtype=jnp.bfloat16))
    assert out_bf16.shape == (batch, out_dim)
    assert jnp.allclose(out_bf16, ref, atol=3e-2, rtol=5e-2), "bf16 mismatch"

    # 3) Ragged batch (not a multiple of the tile) exercises padding + grid > 1.
    z2 = jax.random.normal(kz, (20, z_dim), dtype=jnp.float32)
    ref2 = decoder_reference(z2, w1, b1, w2, b2, w3, b3)
    out2 = jax.block_until_ready(
        decoder_forward(z2, w1, b1, w2, b2, w3, b3,
                        batch_tile=16, compute_dtype=jnp.float32))
    assert out2.shape == (20, out_dim)
    assert jnp.allclose(out2, ref2, atol=1e-5, rtol=1e-5), "padded-batch mismatch"

    print("KERNEL_OK")
</pallas_src>

<mosaic_0001>
module attributes {stable_mosaic.version = 11 : i64} {
  func.func @decoder_kernel(%arg0: i32, %arg1: memref<8x32xf32, #tpu.memory_space<vmem>>, %arg2: memref<32x128xf32, #tpu.memory_space<vmem>>, %arg3: memref<1x128xf32, #tpu.memory_space<vmem>>, %arg4: memref<128x256xf32, #tpu.memory_space<vmem>>, %arg5: memref<1x256xf32, #tpu.memory_space<vmem>>, %arg6: memref<256x128xf32, #tpu.memory_space<vmem>>, %arg7: memref<1x128xf32, #tpu.memory_space<vmem>>, %arg8: memref<8x128xf32, #tpu.memory_space<vmem>>) attributes {dimension_semantics = [#tpu.dimension_semantics<parallel>], iteration_bounds = array<i64: 1>, scalar_prefetch = 0 : i64, scratch_operands = 0 : i64, tpu.core_type = #tpu.core_type<tc>, window_params = [{transform_indices = @transform_0, window_bounds = array<i64: 8, 32>}, {pipeline_mode = #tpu.pipeline_mode<synchronous>, transform_indices = @transform_1, window_bounds = array<i64: 32, 128>}, {pipeline_mode = #tpu.pipeline_mode<synchronous>, transform_indices = @transform_2, window_bounds = array<i64: 1, 128>}, {pipeline_mode = #tpu.pipeline_mode<synchronous>, transform_indices = @transform_3, window_bounds = array<i64: 128, 256>}, {pipeline_mode = #tpu.pipeline_mode<synchronous>, transform_indices = @transform_4, window_bounds = array<i64: 1, 256>}, {pipeline_mode = #tpu.pipeline_mode<synchronous>, transform_indices = @transform_5, window_bounds = array<i64: 256, 128>}, {pipeline_mode = #tpu.pipeline_mode<synchronous>, transform_indices = @transform_6, window_bounds = array<i64: 1, 128>}, {transform_indices = @transform_7, window_bounds = array<i64: 8, 128>}]} {
    %c0 = arith.constant 0 : index
    %c0_0 = arith.constant 0 : index
    %0 = vector.load %arg1[%c0, %c0_0] : memref<8x32xf32, #tpu.memory_space<vmem>>, vector<8x32xf32>
    %c0_1 = arith.constant 0 : index
    %c0_2 = arith.constant 0 : index
    %1 = vector.load %arg2[%c0_1, %c0_2] : memref<32x128xf32, #tpu.memory_space<vmem>>, vector<32x128xf32>
    %cst = arith.constant dense<0.000000e+00> : vector<8x128xf32>
    %2 = tpu.matmul %0, %1, %cst {dimension_numbers = #tpu.dot_dimension_numbers<[1], [0], [0], [1], [0, 0, 1, 1], [], []>} : vector<8x32xf32>, vector<32x128xf32>, vector<8x128xf32> -> vector<8x128xf32>
    %c0_3 = arith.constant 0 : index
    %c0_4 = arith.constant 0 : index
    %3 = vector.load %arg3[%c0_3, %c0_4] : memref<1x128xf32, #tpu.memory_space<vmem>>, vector<1x128xf32>
    %4 = vector.broadcast %3 : vector<1x128xf32> to vector<8x128xf32>
    %5 = arith.addf %2, %4 : vector<8x128xf32>
    %cst_5 = arith.constant 0.000000e+00 : f32
    %6 = vector.broadcast %cst_5 : f32 to vector<8x128xf32>
    %7 = arith.maximumf %5, %6 : vector<8x128xf32>
    %c0_6 = arith.constant 0 : index
    %c0_7 = arith.constant 0 : index
    %8 = vector.load %arg4[%c0_6, %c0_7] : memref<128x256xf32, #tpu.memory_space<vmem>>, vector<128x256xf32>
    %cst_8 = arith.constant dense<0.000000e+00> : vector<8x256xf32>
    %9 = tpu.matmul %7, %8, %cst_8 {dimension_numbers = #tpu.dot_dimension_numbers<[1], [0], [0], [1], [0, 0, 1, 1], [], []>} : vector<8x128xf32>, vector<128x256xf32>, vector<8x256xf32> -> vector<8x256xf32>
    %c0_9 = arith.constant 0 : index
    %c0_10 = arith.constant 0 : index
    %10 = vector.load %arg5[%c0_9, %c0_10] : memref<1x256xf32, #tpu.memory_space<vmem>>, vector<1x256xf32>
    %11 = vector.broadcast %10 : vector<1x256xf32> to vector<8x256xf32>
    %12 = arith.addf %9, %11 : vector<8x256xf32>
    %13 = arith.negf %12 : vector<8x256xf32>
    %14 = math.exp %13 : vector<8x256xf32>
    %cst_11 = arith.constant 1.000000e+00 : f32
    %15 = vector.broadcast %cst_11 : f32 to vector<8x256xf32>
    %16 = arith.addf %15, %14 : vector<8x256xf32>
    %17 = arith.divf %15, %16 : vector<8x256xf32>
    %c0_12 = arith.constant 0 : index
    %c0_13 = arith.constant 0 : index
    %18 = vector.load %arg6[%c0_12, %c0_13] : memref<256x128xf32, #tpu.memory_space<vmem>>, vector<256x128xf32>
    %cst_14 = arith.constant dense<0.000000e+00> : vector<8x128xf32>
    %19 = tpu.matmul %17, %18, %cst_14 {dimension_numbers = #tpu.dot_dimension_numbers<[1], [0], [0], [1], [0, 0, 1, 1], [], []>} : vector<8x256xf32>, vector<256x128xf32>, vector<8x128xf32> -> vector<8x128xf32>
    %c0_15 = arith.constant 0 : index
    %c0_16 = arith.constant 0 : index
    %20 = vector.load %arg7[%c0_15, %c0_16] : memref<1x128xf32, #tpu.memory_space<vmem>>, vector<1x128xf32>
    %21 = vector.broadcast %20 : vector<1x128xf32> to vector<8x128xf32>
    %22 = arith.addf %19, %21 : vector<8x128xf32>
    %23 = arith.negf %22 : vector<8x128xf32>
    %24 = math.exp %23 : vector<8x128xf32>
    %cst_17 = arith.constant 1.000000e+00 : f32
    %25 = vector.broadcast %cst_17 : f32 to vector<8x128xf32>
    %26 = arith.addf %25, %24 : vector<8x128xf32>
    %27 = arith.divf %25, %26 : vector<8x128xf32>
    %c0_18 = arith.constant 0 : index
    %c0_19 = arith.constant 0 : index
    %28 = vector.load %arg8[%c0_18, %c0_19] : memref<8x128xf32, #tpu.memory_space<vmem>>, vector<8x128xf32>
    tpu.vector_store %arg8[%c0_18, %c0_19], %27 {strides = array<i32>} : memref<8x128xf32, #tpu.memory_space<vmem>>, vector<8x128xf32>,
    return
  }
  func.func @transform_0(%arg0: i32) -> (i32, i32) {
    %c0_i32 = arith.constant 0 : i32
    %c0_i32_0 = arith.constant 0 : i32
    return %arg0, %c0_i32 : i32, i32
  }
  func.func @transform_1(%arg0: i32) -> (i32, i32) {
    %c0_i32 = arith.constant 0 : i32
    %c0_i32_0 = arith.constant 0 : i32
    %c0_i32_1 = arith.constant 0 : i32
    return %c0_i32, %c0_i32_0 : i32, i32
  }
  func.func @transform_2(%arg0: i32) -> (i32, i32) {
    %c0_i32 = arith.constant 0 : i32
    %c0_i32_0 = arith.constant 0 : i32
    %c0_i32_1 = arith.constant 0 : i32
    return %c0_i32, %c0_i32_0 : i32, i32
  }
  func.func @transform_3(%arg0: i32) -> (i32, i32) {
    %c0_i32 = arith.constant 0 : i32
    %c0_i32_0 = arith.constant 0 : i32
    %c0_i32_1 = arith.constant 0 : i32
    return %c0_i32, %c0_i32_0 : i32, i32
  }
  func.func @transform_4(%arg0: i32) -> (i32, i32) {
    %c0_i32 = arith.constant 0 : i32
    %c0_i32_0 = arith.constant 0 : i32
    %c0_i32_1 = arith.constant 0 : i32
    return %c0_i32, %c0_i32_0 : i32, i32
  }
  func.func @transform_5(%arg0: i32) -> (i32, i32) {
    %c0_i32 = arith.constant 0 : i32
    %c0_i32_0 = arith.constant 0 : i32
    %c0_i32_1 = arith.constant 0 : i32
    return %c0_i32, %c0_i32_0 : i32, i32
  }
  func.func @transform_6(%arg0: i32) -> (i32, i32) {
    %c0_i32 = arith.constant 0 : i32
    %c0_i32_0 = arith.constant 0 : i32
    %c0_i32_1 = arith.constant 0 : i32
    return %c0_i32, %c0_i32_0 : i32, i32
  }
  func.func @transform_7(%arg0: i32) -> (i32, i32) {
    %c0_i32 = arith.constant 0 : i32
    %c0_i32_0 = arith.constant 0 : i32
    return %arg0, %c0_i32 : i32, i32
  }
}

</mosaic_0001>

<llo_original>
// kernel: decoder_forward.1
$region0: #{decoder_forward.1}
  #allocation0 [shape = 'u32[]', space=smem, size = 0x4, offset = 0x4, fixed_abs, tag = 'smem constant byte address 0x4 - core index']
  #allocation1 [shape = 'u32[144,128]{1,0:T(1,128)}', space=vmem, size = 0x12000, scoped, tag = 'internal scratch']
  %s0 = inlined_call_operand.vmem [shape: f32[8,32], index: 0, kind: input, shape index: {}]
  %s1 = inlined_call_operand.vmem [shape: f32[32,128], index: 1, kind: input, shape index: {}]
  %s2 = inlined_call_operand.vmem [shape: f32[1,128], index: 2, kind: input, shape index: {}]
  %s3 = inlined_call_operand.vmem [shape: f32[128,256], index: 3, kind: input, shape index: {}]
  %s4 = inlined_call_operand.vmem [shape: f32[1,256], index: 4, kind: input, shape index: {}]
  %s5 = inlined_call_operand.vmem [shape: f32[256,128], index: 5, kind: input, shape index: {}]
  %s6 = inlined_call_operand.vmem [shape: f32[1,128], index: 6, kind: input, shape index: {}]
  %s7 = inlined_call_operand.hbm [shape: f32[8,128], index: 7, kind: output, shape index: {}]
  %s8 = sld [smem:[#allocation0]]
  $region38: #{decoder_forward.1} parent=0
    _
  %s10 = ssub.s32 1, %s8
  %s11 = scalar_select 0, %s10, %s8
  $region1: #{decoder_forward.1} parent=0
    #allocation2 [shape = 'u8[4096]{0}', space=vmem, size = 0x1000, scoped, tag = 'output window, operand 0, single buffered']
    #allocation3 [shape = 's32[1]{0}', space=sflag, size = 0x4, scoped, tag = 'scoped memory for decoder_forward.1']
    %12 = vsyncpa [#allocation3], 0
    // Predicated region
    $region2: #{decoder_forward.1} parent=1 // pred_check
      _
    $region3: #{decoder_forward.1} parent=1 // pred_check_branch
      %14 = sbr.rel (0) target = $region5
    $region4: #{decoder_forward.1} parent=1 // pred_region
      _
    $region5: #{decoder_forward.1} parent=1 // pred_fallthru
      _
    // Predicated region
    $region6: #{decoder_forward.1} parent=1 // pred_check
      _
    $region7: #{decoder_forward.1} parent=1 // pred_check_branch
      %16 = sbr.rel (0) target = $region9
    $region8: #{decoder_forward.1} parent=1 // pred_region
      _
    $region9: #{decoder_forward.1} parent=1 // pred_fallthru
      _
    // Predicated region
    $region10: #{decoder_forward.1} parent=1 // pred_check
      _
    $region11: #{decoder_forward.1} parent=1 // pred_check_branch
      %18 = sbr.rel (0) target = $region13
    $region12: #{decoder_forward.1} parent=1 // pred_region
      _
    $region13: #{decoder_forward.1} parent=1 // pred_fallthru
      _
    // Predicated region
    $region14: #{decoder_forward.1} parent=1 // pred_check
      _
    $region15: #{decoder_forward.1} parent=1 // pred_check_branch
      %20 = sbr.rel (0) target = $region17
    $region16: #{decoder_forward.1} parent=1 // pred_region
      _
    $region17: #{decoder_forward.1} parent=1 // pred_fallthru
      _
    // Predicated region
    $region18: #{decoder_forward.1} parent=1 // pred_check
      _
    $region19: #{decoder_forward.1} parent=1 // pred_check_branch
      %22 = sbr.rel (0) target = $region21
    $region20: #{decoder_forward.1} parent=1 // pred_region
      _
    $region21: #{decoder_forward.1} parent=1 // pred_fallthru
      _
    // Predicated region
    $region22: #{decoder_forward.1} parent=1 // pred_check
      _
    $region23: #{decoder_forward.1} parent=1 // pred_check_branch
      %24 = sbr.rel (0) target = $region25
    $region24: #{decoder_forward.1} parent=1 // pred_region
      _
    $region25: #{decoder_forward.1} parent=1 // pred_fallthru
      _
    // Predicated region
    $region26: #{decoder_forward.1} parent=1 // pred_check
      _
    $region27: #{decoder_forward.1} parent=1 // pred_check_branch
      %26 = sbr.rel (0) target = $region29
    $region28: #{decoder_forward.1} parent=1 // pred_region
      _
    $region29: #{decoder_forward.1} parent=1 // pred_fallthru
      _
    %v27 = vld [vmem:[%s0] sm:$0xff]
    %v28 = vld [vmem:[%s1] sm:$0xff]
    %v29 = vld [vmem:[%s1 + $0x8] sm:$0xff]
    %v30 = vld [vmem:[%s1 + $0x10] sm:$0xff]
    %v31 = vld [vmem:[%s1 + $0x18] sm:$0xff]
    %v32 = vld [vmem:[%s2] sm:$0x1]
    %v34 = vlaneseq
    %v35 = vshrl.u32 %v34, 7
    %v36 = vsub.s32 0, %v35
    %v37 = vrot.slane %v32, %v36
    %vm39 = vcmask 261120
    %v41 = vsel %vm39, %v27, 0
    %43 = vmatprep.subr.mxu0 0.0
    %44 = vmatpush1.msra.mxu0 %v28
    %45 = vmatprep.subr.mxu0 0.0
    %46 = vmatpush1.msra.mxu0 %v29
    %47 = vmatprep.subr.mxu0 0.0
    %48 = vmatpush1.msra.mxu0 %v30
    %49 = vmatprep.subr.mxu0 0.0
    %50 = vmatpush1.msra.mxu0 %v31
    %51 = vmatprep.subr.mxu0 0.0
    %52 = vmatpush1.msra.mxu0 0.0
    %53 = vmatprep.subr.mxu0 0.0
    %54 = vmatpush1.msra.mxu0 0.0
    %55 = vmatprep.subr.mxu0 0.0
    %56 = vmatpush1.msra.mxu0 0.0
    %57 = vmatprep.subr.mxu0 0.0
    %58 = vmatpush1.msra.mxu0 0.0
    %59 = vmatprep.subr.mxu0 0.0
    %60 = vmatpush1.msra.mxu0 0.0
    %61 = vmatprep.subr.mxu0 0.0
    %62 = vmatpush1.msra.mxu0 0.0
    %63 = vmatprep.subr.mxu0 0.0
    %64 = vmatpush1.msra.mxu0 0.0
    %65 = vmatprep.subr.mxu0 0.0
    %66 = vmatpush1.msra.mxu0 0.0
    %67 = vmatprep.subr.mxu0 0.0
    %68 = vmatpush1.msra.mxu0 0.0
    %69 = vmatprep.subr.mxu0 0.0
    %70 = vmatpush1.msra.mxu0 0.0
    %71 = vmatprep.subr.mxu0 0.0
    %72 = vmatpush1.msra.mxu0 0.0
    %73 = vmatprep.subr.mxu0 0.0
    %74 = vmatpush1.msra.mxu0 0.0
    %75 = vmatprep.subr.mxu0 0.0
    %76 = vmatpush1.msra.mxu0 0.0
    %77 = vmatprep.subr.mxu0 0.0
    %78 = vmatpush1.msra.mxu0 0.0
    %79 = vmatprep.subr.mxu0 0.0
    %80 = vmatpush1.msra.mxu0 0.0
    %81 = vmatprep.subr.mxu0 0.0
    %82 = vmatpush1.msra.mxu0 0.0
    %83 = vmatprep.subr.mxu0 0.0
    %84 = vmatpush1.msra.mxu0 0.0
    %85 = vmatprep.subr.mxu0 0.0
    %86 = vmatpush1.msra.mxu0 0.0
    %87 = vmatprep.subr.mxu0 0.0
    %88 = vmatpush1.msra.mxu0 0.0
    %89 = vmatprep.subr.mxu0 0.0
    %90 = vmatpush1.msra.mxu0 0.0
    %91 = vmatprep.subr.mxu0 0.0
    %92 = vmatpush1.msra.mxu0 0.0
    %93 = vmatprep.subr.mxu0 0.0
    %94 = vmatpush1.msra.mxu0 0.0
    %95 = vmatprep.subr.mxu0 0.0
    %96 = vmatpush1.msra.mxu0 0.0
    %97 = vmatprep.subr.mxu0 0.0
    %98 = vmatpush1.msra.mxu0 0.0
    %99 = vmatprep.subr.mxu0 0.0
    %100 = vmatpush1.msra.mxu0 0.0
    %101 = vmatprep.subr.mxu0 0.0
    %102 = vmatpush1.msra.mxu0 0.0
    %103 = vmatprep.subr.mxu0 0.0
    %104 = vmatpush1.msra.mxu0 0.0
    %105 = vmatprep.subr.mxu0 0.0
    %106 = vmatpush1.msra.mxu0 0.0
    %107 = vmatprep.mubr.f32.mxu0 0.0
    %108 = vmatmul.mubr.f32.gmra.mrb[0].mxu0 %v41
    %v109 = vpop.f32.mrb[0].mxu0
    %v110 = vadd.f32 %v37, %v109
    %v111 = vpop.f32.mrb[0].mxu0
    %112 = vdwg.mxu0
    %v113 = vmax.f32 %v110, 0.0
    %v114 = vld [vmem:[%s3] sm:$0xff]
    %v115 = vld [vmem:[%s3 + $0x8] sm:$0xff]
    %v116 = vld [vmem:[%s3 + $0x10] sm:$0xff]
    %v117 = vld [vmem:[%s3 + $0x18] sm:$0xff]
    %v118 = vld [vmem:[%s3 + $0x20] sm:$0xff]
    %v119 = vld [vmem:[%s3 + $0x28] sm:$0xff]
    %v120 = vld [vmem:[%s3 + $0x30] sm:$0xff]
    %v121 = vld [vmem:[%s3 + $0x38] sm:$0xff]
    %v122 = vld [vmem:[%s3 + $0x40] sm:$0xff]
    %v123 = vld [vmem:[%s3 + $0x48] sm:$0xff]
    %v124 = vld [vmem:[%s3 + $0x50] sm:$0xff]
    %v125 = vld [vmem:[%s3 + $0x58] sm:$0xff]
    %v126 = vld [vmem:[%s3 + $0x60] sm:$0xff]
    %v127 = vld [vmem:[%s3 + $0x68] sm:$0xff]
    %v128 = vld [vmem:[%s3 + $0x70] sm:$0xff]
    %v129 = vld [vmem:[%s3 + $0x78] sm:$0xff]
    %v130 = vld [vmem:[%s3 + $0x80] sm:$0xff]
    %v131 = vld [vmem:[%s3 + $0x88] sm:$0xff]
    %v132 = vld [vmem:[%s3 + $0x90] sm:$0xff]
    %v133 = vld [vmem:[%s3 + $0x98] sm:$0xff]
    %v134 = vld [vmem:[%s3 + $0xa0] sm:$0xff]
    %v135 = vld [vmem:[%s3 + $0xa8] sm:$0xff]
    %v136 = vld [vmem:[%s3 + $0xb0] sm:$0xff]
    %v137 = vld [vmem:[%s3 + $0xb8] sm:$0xff]
    %v138 = vld [vmem:[%s3 + $0xc0] sm:$0xff]
    %v139 = vld [vmem:[%s3 + $0xc8] sm:$0xff]
    %v140 = vld [vmem:[%s3 + $0xd0] sm:$0xff]
    %v141 = vld [vmem:[%s3 + $0xd8] sm:$0xff]
    %v142 = vld [vmem:[%s3 + $0xe0] sm:$0xff]
    %v143 = vld [vmem:[%s3 + $0xe8] sm:$0xff]
    %v144 = vld [vmem:[%s3 + $0xf0] sm:$0xff]
    %v145 = vld [vmem:[%s3 + $0xf8] sm:$0xff]
    %v146 = vld [vmem:[%s4] sm:$0x3]
    %v148 = vlaneseq
    %v149 = vshrl.u32 %v148, 7
    %v150 = vsub.s32 0, %v149
    %v151 = vrot.slane %v146, %v150
    %v152 = vlaneseq
    %v153 = vshrl.u32 %v152, 7
    %v154 = vsub.s32 1, %v153
    %v155 = vrot.slane %v146, %v154
    %158 = vmatprep.subr.mxu0 %v115
    %159 = vmatpush1.msra.mxu0 %v114
    %160 = vmatprep.subr.mxu0 %v117
    %161 = vmatpush1.msra.mxu0 %v116
    %162 = vmatprep.subr.mxu0 %v119
    %163 = vmatpush1.msra.mxu0 %v118
    %164 = vmatprep.subr.mxu0 %v121
    %165 = vmatpush1.msra.mxu0 %v120
    %166 = vmatprep.subr.mxu0 %v123
    %167 = vmatpush1.msra.mxu0 %v122
    %168 = vmatprep.subr.mxu0 %v125
    %169 = vmatpush1.msra.mxu0 %v124
    %170 = vmatprep.subr.mxu0 %v127
    %171 = vmatpush1.msra.mxu0 %v126
    %172 = vmatprep.subr.mxu0 %v129
    %173 = vmatpush1.msra.mxu0 %v128
    %174 = vmatprep.subr.mxu0 %v131
    %175 = vmatpush1.msra.mxu0 %v130
    %176 = vmatprep.subr.mxu0 %v133
    %177 = vmatpush1.msra.mxu0 %v132
    %178 = vmatprep.subr.mxu0 %v135
    %179 = vmatpush1.msra.mxu0 %v134
    %180 = vmatprep.subr.mxu0 %v137
    %181 = vmatpush1.msra.mxu0 %v136
    %182 = vmatprep.subr.mxu0 %v139
    %183 = vmatpush1.msra.mxu0 %v138
    %184 = vmatprep.subr.mxu0 %v141
    %185 = vmatpush1.msra.mxu0 %v140
    %186 = vmatprep.subr.mxu0 %v143
    %187 = vmatpush1.msra.mxu0 %v142
    %188 = vmatprep.subr.mxu0 %v145
    %189 = vmatpush1.msra.mxu0 %v144
    %190 = vmatprep.subr.mxu0 0.0
    %191 = vmatpush1.msra.mxu0 0.0
    %192 = vmatprep.subr.mxu0 0.0
    %193 = vmatpush1.msra.mxu0 0.0
    %194 = vmatprep.subr.mxu0 0.0
    %195 = vmatpush1.msra.mxu0 0.0
    %196 = vmatprep.subr.mxu0 0.0
    %197 = vmatpush1.msra.mxu0 0.0
    %198 = vmatprep.subr.mxu0 0.0
    %199 = vmatpush1.msra.mxu0 0.0
    %200 = vmatprep.subr.mxu0 0.0
    %201 = vmatpush1.msra.mxu0 0.0
    %202 = vmatprep.subr.mxu0 0.0
    %203 = vmatpush1.msra.mxu0 0.0
    %204 = vmatprep.subr.mxu0 0.0
    %205 = vmatpush1.msra.mxu0 0.0
    %206 = vmatprep.subr.mxu0 0.0
    %207 = vmatpush1.msra.mxu0 0.0
    %208 = vmatprep.subr.mxu0 0.0
    %209 = vmatpush1.msra.mxu0 0.0
    %210 = vmatprep.subr.mxu0 0.0
    %211 = vmatpush1.msra.mxu0 0.0
    %212 = vmatprep.subr.mxu0 0.0
    %213 = vmatpush1.msra.mxu0 0.0
    %214 = vmatprep.subr.mxu0 0.0
    %215 = vmatpush1.msra.mxu0 0.0
    %216 = vmatprep.subr.mxu0 0.0
    %217 = vmatpush1.msra.mxu0 0.0
    %218 = vmatprep.subr.mxu0 0.0
    %219 = vmatpush1.msra.mxu0 0.0
    %220 = vmatprep.subr.mxu0 0.0
    %221 = vmatpush1.msra.mxu0 0.0
    %222 = vmatprep.mubr.f32.mxu0 0.0
    %223 = vmatmul.mubr.f32.gmra.mrb[0].mxu0 %v113
    %v224 = vpop.f32.mrb[0].mxu0
    %v225 = vadd.f32 %v151, %v224
    %v226 = vpop.f32.mrb[0].mxu0
    %v227 = vadd.f32 %v155, %v226
    %228 = vdwg.mxu0
    %v229 = vxor.u32 %v225, 2147483648
    %v230 = vxor.u32 %v227, 2147483648
    %v231 = vmul.f32 %v229, 1.442695
    %v232 = vpow.pop %v231
    %v233 = vmul.f32 %v230, 1.442695
    %v234 = vpow.pop %v233
    %v235 = vadd.f32 %v232, 1.0
    %v236 = vadd.f32 %v234, 1.0
    %v237 = vrcp.pop %v235
    %v238 = vmul.f32 1.0, %v237
    %v239 = vrcp.pop %v236
    %v240 = vmul.f32 1.0, %v239
    %v241 = vld [vmem:[%s5] sm:$0xff]
    %v242 = vld [vmem:[%s5 + $0x8] sm:$0xff]
    %v243 = vld [vmem:[%s5 + $0x10] sm:$0xff]
    %v244 = vld [vmem:[%s5 + $0x18] sm:$0xff]
    %v245 = vld [vmem:[%s5 + $0x20] sm:$0xff]
    %v246 = vld [vmem:[%s5 + $0x28] sm:$0xff]
    %v247 = vld [vmem:[%s5 + $0x30] sm:$0xff]
    %v248 = vld [vmem:[%s5 + $0x38] sm:$0xff]
    %v249 = vld [vmem:[%s5 + $0x40] sm:$0xff]
    %v250 = vld [vmem:[%s5 + $0x48] sm:$0xff]
    %v251 = vld [vmem:[%s5 + $0x50] sm:$0xff]
    %v252 = vld [vmem:[%s5 + $0x58] sm:$0xff]
    %v253 = vld [vmem:[%s5 + $0x60] sm:$0xff]
    %v254 = vld [vmem:[%s5 + $0x68] sm:$0xff]
    %v255 = vld [vmem:[%s5 + $0x70] sm:$0xff]
    %v256 = vld [vmem:[%s5 + $0x78] sm:$0xff]
    %v257 = vld [vmem:[%s5 + $0x80] sm:$0xff]
    %v258 = vld [vmem:[%s5 + $0x88] sm:$0xff]
    %v259 = vld [vmem:[%s5 + $0x90] sm:$0xff]
    %v260 = vld [vmem:[%s5 + $0x98] sm:$0xff]
    %v261 = vld [vmem:[%s5 + $0xa0] sm:$0xff]
    %v262 = vld [vmem:[%s5 + $0xa8] sm:$0xff]
    %v263 = vld [vmem:[%s5 + $0xb0] sm:$0xff]
    %v264 = vld [vmem:[%s5 + $0xb8] sm:$0xff]
    %v265 = vld [vmem:[%s5 + $0xc0] sm:$0xff]
    %v266 = vld [vmem:[%s5 + $0xc8] sm:$0xff]
    %v267 = vld [vmem:[%s5 + $0xd0] sm:$0xff]
    %v268 = vld [vmem:[%s5 + $0xd8] sm:$0xff]
    %v269 = vld [vmem:[%s5 + $0xe0] sm:$0xff]
    %v270 = vld [vmem:[%s5 + $0xe8] sm:$0xff]
    %v271 = vld [vmem:[%s5 + $0xf0] sm:$0xff]
    %v272 = vld [vmem:[%s5 + $0xf8] sm:$0xff]
    %v273 = vld [vmem:[%s6] sm:$0x1]
    %v275 = vlaneseq
    %v276 = vshrl.u32 %v275, 7
    %v277 = vsub.s32 0, %v276
    %v278 = vrot.slane %v273, %v277
    %280 = vmatprep.subr.mxu0 0.0
    %281 = vmatpush1.msra.mxu0 %v241
    %282 = vmatprep.subr.mxu0 0.0
    %283 = vmatpush1.msra.mxu0 %v242
    %284 = vmatprep.subr.mxu0 0.0
    %285 = vmatpush1.msra.mxu0 %v243
    %286 = vmatprep.subr.mxu0 0.0
    %287 = vmatpush1.msra.mxu0 %v244
    %288 = vmatprep.subr.mxu0 0.0
    %289 = vmatpush1.msra.mxu0 %v245
    %290 = vmatprep.subr.mxu0 0.0
    %291 = vmatpush1.msra.mxu0 %v246
    %292 = vmatprep.subr.mxu0 0.0
    %293 = vmatpush1.msra.mxu0 %v247
    %294 = vmatprep.subr.mxu0 0.0
    %295 = vmatpush1.msra.mxu0 %v248
    %296 = vmatprep.subr.mxu0 0.0
    %297 = vmatpush1.msra.mxu0 %v249
    %298 = vmatprep.subr.mxu0 0.0
    %299 = vmatpush1.msra.mxu0 %v250
    %300 = vmatprep.subr.mxu0 0.0
    %301 = vmatpush1.msra.mxu0 %v251
    %302 = vmatprep.subr.mxu0 0.0
    %303 = vmatpush1.msra.mxu0 %v252
    %304 = vmatprep.subr.mxu0 0.0
    %305 = vmatpush1.msra.mxu0 %v253
    %306 = vmatprep.subr.mxu0 0.0
    %307 = vmatpush1.msra.mxu0 %v254
    %308 = vmatprep.subr.mxu0 0.0
    %309 = vmatpush1.msra.mxu0 %v255
    %310 = vmatprep.subr.mxu0 0.0
    %311 = vmatpush1.msra.mxu0 %v256
    %312 = vmatprep.subr.mxu0 0.0
    %313 = vmatpush1.msra.mxu0 %v257
    %314 = vmatprep.subr.mxu0 0.0
    %315 = vmatpush1.msra.mxu0 %v258
    %316 = vmatprep.subr.mxu0 0.0
    %317 = vmatpush1.msra.mxu0 %v259
    %318 = vmatprep.subr.mxu0 0.0
    %319 = vmatpush1.msra.mxu0 %v260
    %320 = vmatprep.subr.mxu0 0.0
    %321 = vmatpush1.msra.mxu0 %v261
    %322 = vmatprep.subr.mxu0 0.0
    %323 = vmatpush1.msra.mxu0 %v262
    %324 = vmatprep.subr.mxu0 0.0
    %325 = vmatpush1.msra.mxu0 %v263
    %326 = vmatprep.subr.mxu0 0.0
    %327 = vmatpush1.msra.mxu0 %v264
    %328 = vmatprep.subr.mxu0 0.0
    %329 = vmatpush1.msra.mxu0 %v265
    %330 = vmatprep.subr.mxu0 0.0
    %331 = vmatpush1.msra.mxu0 %v266
    %332 = vmatprep.subr.mxu0 0.0
    %333 = vmatpush1.msra.mxu0 %v267
    %334 = vmatprep.subr.mxu0 0.0
    %335 = vmatpush1.msra.mxu0 %v268
    %336 = vmatprep.subr.mxu0 0.0
    %337 = vmatpush1.msra.mxu0 %v269
    %338 = vmatprep.subr.mxu0 0.0
    %339 = vmatpush1.msra.mxu0 %v270
    %340 = vmatprep.subr.mxu0 0.0
    %341 = vmatpush1.msra.mxu0 %v271
    %342 = vmatprep.subr.mxu0 0.0
    %343 = vmatpush1.msra.mxu0 %v272
    %344 = vmatprep.mubr.f32.mxu0 %v240
    %345 = vmatmul.mubr.f32.gmra.mrb[0].mxu0 %v238
    %v346 = vpop.f32.mrb[0].mxu0
    %v347 = vadd.f32 %v278, %v346
    %v348 = vpop.f32.mrb[0].mxu0
    %349 = vdwg.mxu0
    %v350 = vxor.u32 %v347, 2147483648
    %v351 = vmul.f32 %v350, 1.442695
    %v352 = vpow.pop %v351
    %v353 = vadd.f32 %v352, 1.0
    %v354 = vrcp.pop %v353
    %v355 = vmul.f32 1.0, %v354
    %356 = vst [vmem:[#allocation2] sm:$0xff] %v355
    // Predicated region
    $region30: #{decoder_forward.1} parent=1 // pred_check
      _
    $region31: #{decoder_forward.1} parent=1 // pred_check_branch
      %358 = sbr.rel (0) target = $region33
    $region32: #{decoder_forward.1} parent=1 // pred_region
      %s360 = ssub.s32 128, 128
      %361 = vsyncadd [#allocation3], %s360
      %s363 = sshll.u32 [#allocation2], 4
      %s364 = int_to_ptr.vmem [resolvable:$true] %s363
      %366 = dma.vmem_to_hbm [thread:$0]  %s364, 128, %s7, [#allocation3]
    $region33: #{decoder_forward.1} parent=1 // pred_fallthru
      _
    // Predicated region
    $region34: #{decoder_forward.1} parent=1 // pred_check
      _
    $region35: #{decoder_forward.1} parent=1 // pred_check_branch
      %368 = sbr.rel (0) target = $region37
    $region36: #{decoder_forward.1} parent=1 // pred_region
      %369 = dma.done [#allocation3], 128
    $region37: #{decoder_forward.1} parent=1 // pred_fallthru
      _
    %370 = vsyncpa [#allocation3], 1

</llo_original>
